<compile_context>
chip_gen: v7x
topology: tpu7x:2x2x1
jax: 0.10.0
libtpu: 0.0.40
codegen_flags: <defaults>
</compile_context>

<pallas_src>
import math

import jax
import jax.numpy as jnp
from jax import lax
from jax.experimental import pallas as pl
from jax.experimental.pallas import tpu as pltpu


def _round_up(a: int, b: int) -> int:
    return ((a + b - 1) // b) * b


def _round_down(a: int, b: int) -> int:
    return (a // b) * b


def _vmem_capacity_bytes() -> int:
    try:
        info = pltpu.get_tpu_info()
        cap = getattr(info, "vmem_capacity_bytes", None)
        if cap:
            return int(cap)
    except Exception:
        pass
    return 64 * 1024 * 1024  # conservative default (v7x per-TC VMEM)


def _pick_block(dim: int, target: int, mult: int) -> int:
    """Block size for one dim: the full dim when it's smaller than `mult`,
    otherwise a multiple of `mult` that is <= min(target, dim)."""
    if dim <= mult:
        return dim
    return max(mult, _round_down(min(target, dim), mult))


# ---------------------------------------------------------------------------
# Kernels
# ---------------------------------------------------------------------------
def _linear_fullk_kernel(x_ref, w_ref, b_ref, o_ref):
    # x_ref: (tm, K)   w_ref: (tn, K)   b_ref: (1, tn)   o_ref: (tm, tn)
    # y[m, n] = sum_k x[m, k] * w[n, k] + b[n]
    # Contract the LAST dim of both operands -> MXU directly, weight never
    # transposed (PyTorch (vocab, d_model) layout preserved).
    acc = lax.dot_general(
        x_ref[...],
        w_ref[...],
        dimension_numbers=(((1,), (1,)), ((), ())),
        preferred_element_type=jnp.float32,
    )
    o_ref[...] = (acc + b_ref[...].astype(jnp.float32)).astype(o_ref.dtype)


def _linear_ksplit_kernel(x_ref, w_ref, b_ref, o_ref, acc_ref):
    # Fallback 3-D grid (N, M, K) for very large d_model.
    k = pl.program_id(2)

    @pl.when(k == 0)
    def _():
        # Fold the bias into the accumulator init (no separate add later).
        acc_ref[...] = jnp.broadcast_to(
            b_ref[...].astype(jnp.float32), acc_ref.shape
        )

    acc_ref[...] += lax.dot_general(
        x_ref[...],
        w_ref[...],
        dimension_numbers=(((1,), (1,)), ((), ())),
        preferred_element_type=jnp.float32,
    )

    @pl.when(k == pl.num_programs(2) - 1)
    def _():
        o_ref[...] = acc_ref[...].astype(o_ref.dtype)


# ---------------------------------------------------------------------------
# Wrapper
# ---------------------------------------------------------------------------
def generator_forward(x, weight, bias, *, tile_m=None, tile_n=None):
    """y = x @ weight.T + bias  (same semantics as nn.Linear.forward).

    x:      (..., d_model)
    weight: (vocab_size, d_model)   -- PyTorch layout, never transposed/copied
    bias:   (vocab_size,)
    """
    *lead, d_model = x.shape
    vocab = weight.shape[0]
    assert weight.shape[1] == d_model and bias.shape == (vocab,)
    m = int(math.prod(lead)) if lead else 1
    x2d = x.reshape(m, d_model)
    b2d = bias.reshape(1, vocab)
    out_dtype = x.dtype
    itemsize = jnp.dtype(x.dtype).itemsize

    # --- device-aware tile targets ------------------------------------------
    vmem_cap = _vmem_capacity_bytes()
    budget = int(vmem_cap * 0.70)              # working-set budget (headroom)
    big_vmem = vmem_cap >= 100 * 1024 * 1024   # v5e / v6e (128 MiB)
    if tile_m is None:
        tile_m = 1024 if big_vmem else 512
    if tile_n is None:
        tile_n = 2048 if big_vmem else 1024

    sublane = max(8, 32 // itemsize)           # 8 f32 / 16 bf16 / 32 int8
    lane_n = 256 if vocab >= 256 else 128      # fill 256-wide MXU when possible

    tm = _pick_block(m, tile_m, sublane)
    tn = _pick_block(vocab, tile_n, lane_n)
    tk = d_model                               # K fully resident: no K padding

    def fullk_bytes(tm_, tn_):
        # double-buffered x / weight / output / bias tiles
        return 2 * (tm_ * tk + tn_ * tk + tm_ * tn_ + tn_) * itemsize

    # Shrink tiles until the double-buffered working set fits the budget.
    while fullk_bytes(tm, tn) > budget:
        if tn > 128 and tn >= tm:
            tn = max(128, _round_down(tn // 2, 128))
        elif tm > sublane:
            tm = max(sublane, _round_down(tm // 2, sublane))
        else:
            break

    if fullk_bytes(tm, tn) <= budget:
        # ------------------- main path: K resident, 2-D grid ----------------
        grid_n = pl.cdiv(vocab, tn)
        grid_m = pl.cdiv(m, tm)
        vmem_limit = min(
            int(vmem_cap * 0.85),
            max(int(fullk_bytes(tm, tn) * 1.3), 32 * 1024 * 1024),
        )
        cost = pl.CostEstimate(
            flops=2 * m * d_model * vocab,
            transcendentals=0,
            bytes_accessed=(
                vocab * d_model * itemsize           # weight streamed once
                + grid_n * m * d_model * itemsize    # x re-read per vocab tile
                + vocab * itemsize                   # bias once
                + m * vocab * itemsize               # output
            ),
        )
        out = pl.pallas_call(
            _linear_fullk_kernel,
            out_shape=jax.ShapeDtypeStruct((m, vocab), out_dtype),
            grid_spec=pltpu.PrefetchScalarGridSpec(
                num_scalar_prefetch=0,
                # Vocab OUTER: weight tile index_map constant across the inner
                # M loop (weight read from HBM exactly once) and megacore
                # sharding on the leading axis splits the weight across TCs.
                grid=(grid_n, grid_m),
                in_specs=[
                    pl.BlockSpec((tm, tk), lambda j, i: (i, 0)),  # x
                    pl.BlockSpec((tn, tk), lambda j, i: (j, 0)),  # weight (vocab, d_model)
                    pl.BlockSpec((1, tn), lambda j, i: (0, j)),   # bias
                ],
                out_specs=pl.BlockSpec((tm, tn), lambda j, i: (i, j)),
            ),
            compiler_params=pltpu.CompilerParams(
                dimension_semantics=("parallel", "parallel"),
                vmem_limit_bytes=int(vmem_limit),
            ),
            cost_estimate=cost,
        )(x2d, weight, b2d)
        return out.reshape(*lead, vocab)

    # ---------------- fallback: d_model too large to keep resident ----------
    # TODO(synk): only exercised for extreme d_model; K is zero-padded per
    # call so the reduction stays exact.
    tm = _pick_block(m, 512, sublane)
    tn = _pick_block(vocab, 1024, lane_n)
    tk = 2048

    def ksplit_bytes(tm_, tn_, tk_):
        return (
            2 * (tm_ * tk_ + tn_ * tk_ + tm_ * tn_ + tn_) * itemsize
            + tm_ * tn_ * 4  # f32 accumulator scratch (single-buffered)
        )

    while tk > 128 and ksplit_bytes(tm, tn, tk) > budget:
        tk //= 2

    k_pad = _round_up(d_model, tk)
    xk, wk = x2d, weight
    if k_pad != d_model:
        xk = jnp.pad(x2d, ((0, 0), (0, k_pad - d_model)))
        wk = jnp.pad(weight, ((0, 0), (0, k_pad - d_model)))

    grid_n = pl.cdiv(vocab, tn)
    grid_m = pl.cdiv(m, tm)
    grid_k = k_pad // tk
    vmem_limit = min(
        int(vmem_cap * 0.85),
        max(int(ksplit_bytes(tm, tn, tk) * 1.3), 32 * 1024 * 1024),
    )
    cost = pl.CostEstimate(
        flops=2 * m * d_model * vocab,
        transcendentals=0,
        bytes_accessed=(
            grid_m * vocab * k_pad * itemsize
            + grid_n * m * k_pad * itemsize
            + vocab * itemsize
            + m * vocab * itemsize
        ),
    )
    out = pl.pallas_call(
        _linear_ksplit_kernel,
        out_shape=jax.ShapeDtypeStruct((m, vocab), out_dtype),
        grid_spec=pltpu.PrefetchScalarGridSpec(
            num_scalar_prefetch=0,
            grid=(grid_n, grid_m, grid_k),
            in_specs=[
                pl.BlockSpec((tm, tk), lambda j, i, k: (i, k)),
                pl.BlockSpec((tn, tk), lambda j, i, k: (j, k)),
                pl.BlockSpec((1, tn), lambda j, i, k: (0, j)),
            ],
            out_specs=pl.BlockSpec((tm, tn), lambda j, i, k: (i, j)),
            scratch_shapes=[pltpu.VMEM((tm, tn), jnp.float32)],
        ),
        compiler_params=pltpu.CompilerParams(
            dimension_semantics=("parallel", "parallel", "arbitrary"),
            vmem_limit_bytes=int(vmem_limit),
        ),
        cost_estimate=cost,
    )(xk, wk, b2d)
    return out.reshape(*lead, vocab)


def init_generator_params(key, d_model, vocab_size, dtype=jnp.float32):
    # Matches nn.Linear default init: U(-1/sqrt(fan_in), +1/sqrt(fan_in))
    kw, kb = jax.random.split(key)
    bound = 1.0 / math.sqrt(d_model)
    weight = jax.random.uniform(kw, (vocab_size, d_model), dtype, -bound, bound)
    bias = jax.random.uniform(kb, (vocab_size,), dtype, -bound, bound)
    return weight, bias


if __name__ == "__main__":
    batch, seq, d_model, vocab_size = 2, 8, 32, 64

    key = jax.random.PRNGKey(0)
    kx, kp = jax.random.split(key)
    x = jax.random.normal(kx, (batch, seq, d_model), jnp.float32)
    weight, bias = init_generator_params(kp, d_model, vocab_size)

    y = jax.block_until_ready(generator_forward(x, weight, bias))

    # Reference check against plain JAX (same math as torch nn.Linear forward).
    y_ref = x @ weight.T + bias
    assert y.shape == (batch, seq, vocab_size)
    assert jnp.allclose(y, y_ref, atol=1e-5, rtol=1e-5)

    print("KERNEL_OK")
</pallas_src>

<mosaic_0001>
module attributes {stable_mosaic.version = 11 : i64} {
  func.func @_linear_fullk_kernel(%arg0: i32, %arg1: i32, %arg2: memref<16x32xf32, #tpu.memory_space<vmem>>, %arg3: memref<64x32xf32, #tpu.memory_space<vmem>>, %arg4: memref<1x64xf32, #tpu.memory_space<vmem>>, %arg5: memref<16x64xf32, #tpu.memory_space<vmem>>) attributes {dimension_semantics = [#tpu.dimension_semantics<parallel>, #tpu.dimension_semantics<parallel>], iteration_bounds = array<i64: 1, 1>, scalar_prefetch = 0 : i64, scratch_operands = 0 : i64, tpu.core_type = #tpu.core_type<tc>, window_params = [{transform_indices = @transform_0, window_bounds = array<i64: 16, 32>}, {transform_indices = @transform_1, window_bounds = array<i64: 64, 32>}, {transform_indices = @transform_2, window_bounds = array<i64: 1, 64>}, {transform_indices = @transform_3, window_bounds = array<i64: 16, 64>}]} {
    %c0 = arith.constant 0 : index
    %c0_0 = arith.constant 0 : index
    %0 = vector.load %arg2[%c0, %c0_0] : memref<16x32xf32, #tpu.memory_space<vmem>>, vector<16x32xf32>
    %c0_1 = arith.constant 0 : index
    %c0_2 = arith.constant 0 : index
    %1 = vector.load %arg3[%c0_1, %c0_2] : memref<64x32xf32, #tpu.memory_space<vmem>>, vector<64x32xf32>
    %cst = arith.constant dense<0.000000e+00> : vector<16x64xf32>
    %2 = tpu.matmul %0, %1, %cst {dimension_numbers = #tpu.dot_dimension_numbers<[1], [1], [0], [0], [0, 0, 1, 0], [], []>} : vector<16x32xf32>, vector<64x32xf32>, vector<16x64xf32> -> vector<16x64xf32>
    %c0_3 = arith.constant 0 : index
    %c0_4 = arith.constant 0 : index
    %3 = vector.load %arg4[%c0_3, %c0_4] : memref<1x64xf32, #tpu.memory_space<vmem>>, vector<1x64xf32>
    %4 = vector.broadcast %3 : vector<1x64xf32> to vector<16x64xf32>
    %5 = arith.addf %2, %4 : vector<16x64xf32>
    %c0_5 = arith.constant 0 : index
    %c0_6 = arith.constant 0 : index
    %6 = vector.load %arg5[%c0_5, %c0_6] : memref<16x64xf32, #tpu.memory_space<vmem>>, vector<16x64xf32>
    tpu.vector_store %arg5[%c0_5, %c0_6], %5 {strides = array<i32>} : memref<16x64xf32, #tpu.memory_space<vmem>>, vector<16x64xf32>,
    return
  }
  func.func @transform_0(%arg0: i32, %arg1: i32) -> (i32, i32) {
    %c0_i32 = arith.constant 0 : i32
    %c0_i32_0 = arith.constant 0 : i32
    return %arg1, %c0_i32 : i32, i32
  }
  func.func @transform_1(%arg0: i32, %arg1: i32) -> (i32, i32) {
    %c0_i32 = arith.constant 0 : i32
    %c0_i32_0 = arith.constant 0 : i32
    return %arg0, %c0_i32 : i32, i32
  }
  func.func @transform_2(%arg0: i32, %arg1: i32) -> (i32, i32) {
    %c0_i32 = arith.constant 0 : i32
    %c0_i32_0 = arith.constant 0 : i32
    return %c0_i32, %arg0 : i32, i32
  }
  func.func @transform_3(%arg0: i32, %arg1: i32) -> (i32, i32) {
    %c0_i32 = arith.constant 0 : i32
    return %arg1, %arg0 : i32, i32
  }
}

</mosaic_0001>

<llo_original>
// kernel: tpu_custom_call.1
$region0: #{tpu_custom_call.1}
  #allocation0 [shape = 'u32[]', space=smem, size = 0x4, offset = 0x4, fixed_abs, tag = 'smem constant byte address 0x4 - core index']
  #allocation1 [shape = 'u32[144,128]{1,0:T(1,128)}', space=vmem, size = 0x12000, scoped, tag = 'internal scratch']
  %s0 = inlined_call_operand.vmem [shape: f32[16,32], index: 0, kind: input, shape index: {}]
  %s1 = inlined_call_operand.vmem [shape: f32[64,32], index: 1, kind: input, shape index: {}]
  %s2 = inlined_call_operand.vmem [shape: f32[1,64], index: 2, kind: input, shape index: {}]
  %s3 = inlined_call_operand.hbm [shape: f32[16,64], index: 3, kind: output, shape index: {}]
  %s4 = sld [smem:[#allocation0]]
  $region22: #{tpu_custom_call.1} parent=0
    _
  %s6 = ssub.s32 1, %s4
  %s7 = scalar_select 0, %s6, %s4
  $region1: #{tpu_custom_call.1} parent=0
    #allocation2 [shape = 'u8[8192]{0}', space=vmem, size = 0x2000, scoped, tag = 'output window, operand 0, single buffered']
    #allocation3 [shape = 's32[1]{0}', space=sflag, size = 0x4, scoped, tag = 'scoped memory for tpu_custom_call.1']
    %8 = vsyncpa [#allocation3], 0
    // Predicated region
    $region2: #{tpu_custom_call.1} parent=1 // pred_check
      _
    $region3: #{tpu_custom_call.1} parent=1 // pred_check_branch
      %10 = sbr.rel (0) target = $region5
    $region4: #{tpu_custom_call.1} parent=1 // pred_region
      _
    $region5: #{tpu_custom_call.1} parent=1 // pred_fallthru
      _
    // Predicated region
    $region6: #{tpu_custom_call.1} parent=1 // pred_check
      _
    $region7: #{tpu_custom_call.1} parent=1 // pred_check_branch
      %12 = sbr.rel (0) target = $region9
    $region8: #{tpu_custom_call.1} parent=1 // pred_region
      _
    $region9: #{tpu_custom_call.1} parent=1 // pred_fallthru
      _
    // Predicated region
    $region10: #{tpu_custom_call.1} parent=1 // pred_check
      _
    $region11: #{tpu_custom_call.1} parent=1 // pred_check_branch
      %14 = sbr.rel (0) target = $region13
    $region12: #{tpu_custom_call.1} parent=1 // pred_region
      _
    $region13: #{tpu_custom_call.1} parent=1 // pred_fallthru
      _
    %v15 = vld [vmem:[%s0] sm:$0xff]
    %v16 = vld [vmem:[%s0 + $0x8] sm:$0xff]
    %v17 = vld [vmem:[%s1] sm:$0xff]
    %v18 = vld [vmem:[%s1 + $0x8] sm:$0xff]
    %v19 = vld [vmem:[%s1 + $0x10] sm:$0xff]
    %v20 = vld [vmem:[%s1 + $0x18] sm:$0xff]
    %v21 = vld [vmem:[%s1 + $0x20] sm:$0xff]
    %v22 = vld [vmem:[%s1 + $0x28] sm:$0xff]
    %v23 = vld [vmem:[%s1 + $0x30] sm:$0xff]
    %v24 = vld [vmem:[%s1 + $0x38] sm:$0xff]
    %v25 = vld [vmem:[%s2] sm:$0x1]
    %v27 = vlaneseq
    %v28 = vshrl.u32 %v27, 7
    %v29 = vsub.s32 0, %v28
    %v30 = vrot.slane %v25, %v29
    %vm32 = vcmask 261120
    %v34 = vsel %vm32, %v15, 0
    %v37 = vsel %vm32, %v16, 0
    %v40 = vsel %vm32, %v17, 0
    %v43 = vsel %vm32, %v18, 0
    %v46 = vsel %vm32, %v19, 0
    %v49 = vsel %vm32, %v20, 0
    %v52 = vsel %vm32, %v21, 0
    %v55 = vsel %vm32, %v22, 0
    %v58 = vsel %vm32, %v23, 0
    %v61 = vsel %vm32, %v24, 0
    %63 = vmatprep.subr.mxu0 0.0
    %64 = vmatpush1.xpose.msra.mxu0 %v40
    %65 = vmatprep.subr.mxu0 0.0
    %66 = vmatpush1.xpose.msra.mxu0 %v43
    %67 = vmatprep.subr.mxu0 0.0
    %68 = vmatpush1.xpose.msra.mxu0 %v46
    %69 = vmatprep.subr.mxu0 0.0
    %70 = vmatpush1.xpose.msra.mxu0 %v49
    %71 = vmatprep.subr.mxu0 0.0
    %72 = vmatpush1.xpose.msra.mxu0 %v52
    %73 = vmatprep.subr.mxu0 0.0
    %74 = vmatpush1.xpose.msra.mxu0 %v55
    %75 = vmatprep.subr.mxu0 0.0
    %76 = vmatpush1.xpose.msra.mxu0 %v58
    %77 = vmatprep.subr.mxu0 0.0
    %78 = vmatpush1.xpose.msra.mxu0 %v61
    %79 = vmatprep.subr.mxu0 0.0
    %80 = vmatpush1.xpose.msra.mxu0 0.0
    %81 = vmatprep.subr.mxu0 0.0
    %82 = vmatpush1.xpose.msra.mxu0 0.0
    %83 = vmatprep.subr.mxu0 0.0
    %84 = vmatpush1.xpose.msra.mxu0 0.0
    %85 = vmatprep.subr.mxu0 0.0
    %86 = vmatpush1.xpose.msra.mxu0 0.0
    %87 = vmatprep.subr.mxu0 0.0
    %88 = vmatpush1.xpose.msra.mxu0 0.0
    %89 = vmatprep.subr.mxu0 0.0
    %90 = vmatpush1.xpose.msra.mxu0 0.0
    %91 = vmatprep.subr.mxu0 0.0
    %92 = vmatpush1.xpose.msra.mxu0 0.0
    %93 = vmatprep.subr.mxu0 0.0
    %94 = vmatpush1.xpose.msra.mxu0 0.0
    %95 = vmatprep.subr.mxu0 0.0
    %96 = vmatpush1.xpose.msra.mxu0 0.0
    %97 = vmatprep.subr.mxu0 0.0
    %98 = vmatpush1.xpose.msra.mxu0 0.0
    %99 = vmatprep.subr.mxu0 0.0
    %100 = vmatpush1.xpose.msra.mxu0 0.0
    %101 = vmatprep.subr.mxu0 0.0
    %102 = vmatpush1.xpose.msra.mxu0 0.0
    %103 = vmatprep.subr.mxu0 0.0
    %104 = vmatpush1.xpose.msra.mxu0 0.0
    %105 = vmatprep.subr.mxu0 0.0
    %106 = vmatpush1.xpose.msra.mxu0 0.0
    %107 = vmatprep.subr.mxu0 0.0
    %108 = vmatpush1.xpose.msra.mxu0 0.0
    %109 = vmatprep.subr.mxu0 0.0
    %110 = vmatpush1.xpose.msra.mxu0 0.0
    %111 = vmatprep.subr.mxu0 0.0
    %112 = vmatpush1.xpose.msra.mxu0 0.0
    %113 = vmatprep.subr.mxu0 0.0
    %114 = vmatpush1.xpose.msra.mxu0 0.0
    %115 = vmatprep.subr.mxu0 0.0
    %116 = vmatpush1.xpose.msra.mxu0 0.0
    %117 = vmatprep.subr.mxu0 0.0
    %118 = vmatpush1.xpose.msra.mxu0 0.0
    %119 = vmatprep.subr.mxu0 0.0
    %120 = vmatpush1.xpose.msra.mxu0 0.0
    %121 = vmatprep.subr.mxu0 0.0
    %122 = vmatpush1.xpose.msra.mxu0 0.0
    %123 = vmatprep.subr.mxu0 0.0
    %124 = vmatpush1.xpose.msra.mxu0 0.0
    %125 = vmatprep.subr.mxu0 0.0
    %126 = vmatpush1.xpose.msra.mxu0 0.0
    %127 = vmatprep.mubr.f32.mxu0 0.0
    %128 = vmatmul.mubr.f32.gmra.mrb[0].mxu0 %v34
    %v129 = vpop.f32.mrb[0].mxu0
    %v130 = vadd.f32 %v30, %v129
    %v131 = vpop.f32.mrb[0].mxu0
    %132 = vmatprep.mubr.f32.mxu0 0.0
    %133 = vmatmul.mubr.f32.gmra.mrb[0].mxu0 %v37
    %v134 = vpop.f32.mrb[0].mxu0
    %v135 = vadd.f32 %v30, %v134
    %v136 = vpop.f32.mrb[0].mxu0
    %137 = vdwg.mxu0
    %vm138 = vcmask 523264
    %139 = vst.msk [vmem:[#allocation2] sm:$0xff] %vm138, %v130
    %140 = vst.msk [vmem:[#allocation2 + $0x8] sm:$0xff] %vm138, %v135
    // Predicated region
    $region14: #{tpu_custom_call.1} parent=1 // pred_check
      _
    $region15: #{tpu_custom_call.1} parent=1 // pred_check_branch
      %142 = sbr.rel (0) target = $region17
    $region16: #{tpu_custom_call.1} parent=1 // pred_region
      %s144 = ssub.s32 256, 256
      %145 = vsyncadd [#allocation3], %s144
      %s146 = sshll.u32 [#allocation2], 4
      %s147 = int_to_ptr.vmem [resolvable:$true] %s146
      %152 = dma.vmem_to_hbm [thread:$0]  %s147, 256, %s3, [#allocation3], 128, 128, 8
    $region17: #{tpu_custom_call.1} parent=1 // pred_fallthru
      _
    // Predicated region
    $region18: #{tpu_custom_call.1} parent=1 // pred_check
      _
    $region19: #{tpu_custom_call.1} parent=1 // pred_check_branch
      %154 = sbr.rel (0) target = $region21
    $region20: #{tpu_custom_call.1} parent=1 // pred_region
      %155 = dma.done [#allocation3], 256
    $region21: #{tpu_custom_call.1} parent=1 // pred_fallthru
      _
    %156 = vsyncpa [#allocation3], 1

</llo_original>
